<compile_context>
chip_gen: v7x
topology: tpu7x:2x2x1
jax: 0.10.0
libtpu: 0.0.40
codegen_flags: <defaults>
</compile_context>

<pallas_src>
import functools

import numpy as np
import jax
import jax.numpy as jnp
from jax.experimental import pallas as pl
from jax.experimental.pallas import tpu as pltpu


# ---------------------------------------------------------------------------
# Fused kernel: one grid step assembles one batch row of the padded prompt:
#   emb[i] = [ pad x (P - tam_i) | part1 | phrase_i[0:tam_i] | up1 | dom | up2 | part2 ]
# The phrase embeddings are gathered here (HBM row DMAs driven by SMEM ids), so no
# (B, P, D) intermediate ever touches HBM.
# ---------------------------------------------------------------------------
def _assemble_kernel(lens_ref, ids_ref, table_ref, head_ref, tail_ref,
                     emb_ref, stage_ref, sems):
    i = pl.program_id(0)
    Hh = head_ref.shape[0]            # Hh = P + L1 (static)
    P = stage_ref.shape[0] - Hh       # max phrase slots (static)
    T = emb_ref.shape[0]              # full assembled length (static)
    tam = lens_ref[i]                 # live phrase length for this row (0..P, dynamic)

    # (1) Kick off one row-DMA per live phrase token: HBM table[id] -> stage[Hh + j].
    #     All `tam` tiny copies stay in flight concurrently (they are latency-bound).
    @pl.loop(0, tam)
    def _(j):
        row = ids_ref[i * P + j]
        pltpu.make_async_copy(table_ref.at[pl.ds(row, 1)],
                              stage_ref.at[pl.ds(Hh + j, 1)],
                              sems.at[j]).start()

    # (2) Batch-invariant staging prefix [pad x P | part1] (overlaps the row DMAs).
    stage_ref[0:Hh, :] = head_ref[...]

    # (3) Static tail of the prompt (user_part1 | domain | user_part2 | part2):
    #     one contiguous block store straight into the output block.
    emb_ref[Hh:T, :] = tail_ref[...]

    # (4) Wait for the phrase-row gathers.
    @pl.loop(0, tam)
    def _(j):
        pltpu.make_async_copy(table_ref.at[pl.ds(0, 1)],
                              stage_ref.at[pl.ds(Hh + j, 1)],
                              sems.at[j]).wait()

    # (5) Left-padded head = window of stage of static length Hh starting at `tam`:
    #       rows [tam, P)         -> padding embedding
    #       rows [P, P+L1)        -> part1
    #       rows [P+L1, P+L1+tam) -> phrase[0:tam]
    #     Done with a local VMEM->VMEM DMA so the sublane-unaligned copy stays off the
    #     VLIW load/store slots.
    win = pltpu.make_async_copy(stage_ref.at[pl.ds(tam, Hh)],
                                emb_ref.at[pl.ds(0, Hh)],
                                sems.at[P])
    win.start()
    win.wait()


@functools.lru_cache(maxsize=None)
def _build_assemble_call(B, P, L1, Lt, D, dtype_str):
    dtype = jnp.dtype(dtype_str)
    Hh = P + L1                       # dynamic-window head length
    T = Hh + Lt                       # full assembled sequence length
    itemsize = dtype.itemsize
    # double-buffered in/out blocks + stage scratch (+ headroom); table stays in HBM.
    vmem_bytes = (2 * (Hh + Lt + T) + (P + Hh)) * D * itemsize
    vmem_limit = int(max(8 << 20, 2 * vmem_bytes + (2 << 20)))

    grid_spec = pltpu.PrefetchScalarGridSpec(
        num_scalar_prefetch=2,                                    # lens (B,), ids (B*P,)
        grid=(B,),
        in_specs=[
            pl.BlockSpec(memory_space=pl.ANY),                    # embedding table (HBM)
            pl.BlockSpec((Hh, D), lambda i, lens, ids: (0, 0)),   # [pad x P | part1]
            pl.BlockSpec((Lt, D), lambda i, lens, ids: (0, 0)),   # [up1 | dom | up2 | part2]
        ],
        out_specs=pl.BlockSpec((None, T, D), lambda i, lens, ids: (i, 0, 0)),
        scratch_shapes=[
            pltpu.VMEM((P + Hh, D), dtype),                       # stage buffer
            pltpu.SemaphoreType.DMA((P + 1,)),                    # P row DMAs + window DMA
        ],
    )
    call = pl.pallas_call(
        _assemble_kernel,
        out_shape=jax.ShapeDtypeStruct((B, T, D), dtype),
        grid_spec=grid_spec,
        compiler_params=pltpu.CompilerParams(
            dimension_semantics=("parallel",),                    # batch rows independent
            vmem_limit_bytes=vmem_limit,
        ),
    )
    return jax.jit(call)


def assemble_padded_inputs(lens, ids, table, head_const, tail):
    """lens (B,), ids (B, P) int32; table (V, D); head_const (P+L1, D); tail (Lt, D)."""
    B, P = (int(s) for s in ids.shape)
    L1 = int(head_const.shape[0]) - P
    Lt = int(tail.shape[0])
    D = int(table.shape[1])
    call = _build_assemble_call(B, P, L1, Lt, D, str(jnp.dtype(table.dtype)))
    return call(jnp.asarray(lens, jnp.int32),
                jnp.asarray(ids, jnp.int32).reshape(-1),
                table, head_const, tail)


# ---------------------------------------------------------------------------
# Python wrapper mirroring PhraseGeneratorModel (minus the external HF LLM).
# ---------------------------------------------------------------------------
class PhraseGeneratorModelPallas:
    def __init__(self, weights_values, eos_token_id, complete_token_id,
                 initial_domain_ids, max_phrase_length=48):
        self.weights_values = jnp.asarray(weights_values)
        V = int(self.weights_values.shape[0])
        self.eos_token_id = int(eos_token_id)
        # PyTorch uses complete_token_id = -1 (last embedding row); emulate with mod.
        self.complete_token_id = int(complete_token_id) % V
        self.max_phrase_length = int(max_phrase_length)

        W = self.weights_values
        # One-shot setup gathers: plain XLA takes (not on the per-forward hot path).
        self.embedding_padding = jnp.take(
            W, jnp.array([self.eos_token_id], jnp.int32), axis=0)          # (1, D)
        self.embedding_complete_token = jnp.take(
            W, jnp.array([self.complete_token_id], jnp.int32), axis=0)     # (1, D)
        self.learnable_domain_weights = jnp.take(
            W, jnp.asarray(initial_domain_ids, jnp.int32), axis=0)         # (Ld, D)
        self.prompts = {}

    def add_prompt(self, prompt_token_ids, name="DEFAULT"):
        W = self.weights_values
        p = {k: jnp.take(W, jnp.asarray(v, jnp.int32), axis=0)
             for k, v in prompt_token_ids.items()}
        p["input_size_without_phrase"] = (
            p["inputs_embeds_part1"].shape[0]
            + p["inputs_embeds_user_part1"].shape[0]
            + p["inputs_embeds_user_part2"].shape[0]
            + p["inputs_embeds_part2"].shape[0])
        p["_head_cache"] = {}
        self.prompts[name] = p
        self._head_const(p, self.max_phrase_length)   # pre-build for the default P

    def _head_const(self, p, P):
        hc = p["_head_cache"].get(P)
        if hc is None:
            D = int(self.weights_values.shape[1])
            hc = jnp.concatenate(
                [jnp.broadcast_to(self.embedding_padding, (P, D)),
                 p["inputs_embeds_part1"]], axis=0)
            p["_head_cache"][P] = hc
        return hc

    def forward(self, inputs, clean_input=False, prompt="DEFAULT", phrase_slots=None):
        x = jnp.asarray(inputs["input_ids"], jnp.int32)
        B = int(x.shape[0])
        V = int(self.weights_values.shape[0])
        # Static phrase-slot count (default): avoids the host sync + batch-max-dependent
        # recompiles of PyTorch's `max_frase_size`.  Pass phrase_slots=int(...) if exact
        # PyTorch batch-max shapes are required.
        P = self.max_phrase_length if phrase_slots is None else int(phrase_slots)

        x2 = x.reshape(B, -1)[:, :P]                   # (B, Lc), Lc <= P
        Lc = int(x2.shape[1])

        if clean_input:   # truncate each phrase at its first "complete" token
            is_c = x2 == self.complete_token_id
            has = jnp.any(is_c, axis=1)
            first = jnp.argmax(is_c.astype(jnp.int32), axis=1)
            lens = jnp.where(has, first, Lc).astype(jnp.int32)
        else:
            lens = jnp.full((B,), Lc, jnp.int32)
        lens = jnp.clip(lens, 0, P)

        # ids padded out to P slots; positions >= lens[i] are never read by the kernel.
        ids = jnp.zeros((B, P), jnp.int32).at[:, :Lc].set(x2)
        ids = jnp.clip(ids, 0, V - 1)

        p = self.prompts[prompt]
        head_const = self._head_const(p, P)            # [pad x P | part1]
        tail = jnp.concatenate([p["inputs_embeds_user_part1"],
                                self.learnable_domain_weights,
                                p["inputs_embeds_user_part2"],
                                p["inputs_embeds_part2"]], axis=0)

        emb = assemble_padded_inputs(lens, ids, self.weights_values, head_const, tail)

        # Attention mask depends only on lens -> plain XLA, no kernel output needed.
        T = int(emb.shape[1])
        mask = (jnp.arange(T, dtype=jnp.int32)[None, :]
                >= (P - lens)[:, None]).astype(jnp.int32)
        # TODO(synk): self.llm_model.generate(inputs_embeds=emb, attention_mask=mask, ...)
        # and the return_output_embeddings LLM forward + tokenizer.decode are an external
        # HF LLM (and the anchor/_next_noun tokenizer path); everything the module itself
        # computes before that call is produced here.
        return emb, mask


# ---------------------------------------------------------------------------
if __name__ == "__main__":
    key = jax.random.PRNGKey(0)
    k_w, k_x = jax.random.split(key)

    V, D, B = 64, 128, 2
    MAXP = 16                         # static phrase-slot count for the demo
    weights_values = jax.random.normal(k_w, (V, D), jnp.float32)

    eos_token_id = 2
    complete_token_id = 63            # stand-in for the module's `-1` (last table row)
    # deterministic stand-ins for tokenizer.encode(...) outputs
    domain_ids = jnp.array([10, 11, 12], jnp.int32)                      # 'financial'
    prompt_ids = {
        "inputs_embeds_part1": jnp.array([3, 4, 5, 6, 7], jnp.int32),
        "inputs_embeds_part2": jnp.array([20, 21, 22, 23], jnp.int32),
        "inputs_embeds_user_part1": jnp.array([30, 31, 32], jnp.int32),
        "inputs_embeds_user_part2": jnp.array([40, 41, 42], jnp.int32),
    }

    model = PhraseGeneratorModelPallas(weights_values, eos_token_id, complete_token_id,
                                       domain_ids, max_phrase_length=MAXP)
    model.add_prompt(prompt_ids)

    # input phrases: (B, 1, 12) token ids; "complete" token marks ragged lengths 5 / 9
    x = jax.random.randint(k_x, (B, 1, 12), 3, 60, dtype=jnp.int32)
    x = x.at[0, 0, 5].set(complete_token_id)
    x = x.at[1, 0, 9].set(complete_token_id)

    emb, mask = model.forward({"input_ids": x}, clean_input=True)
    emb = jax.block_until_ready(emb)
    mask = jax.block_until_ready(mask)

    # ---- pure-NumPy reference of the same forward stage (same static P slots;
    #      PyTorch would use the batch-max phrase length instead) ----
    Wn = np.asarray(weights_values)
    xs = np.asarray(x)
    P = MAXP
    lens_np, phrases = [], []
    for i in range(B):
        f = xs[i, 0, :P]
        hits = np.nonzero(f == complete_token_id)[0]
        pos = int(hits[0]) if hits.size else int(f.shape[0])
        phrases.append(f[:pos])
        lens_np.append(pos)
    part1 = Wn[np.asarray(prompt_ids["inputs_embeds_part1"])]
    part2 = Wn[np.asarray(prompt_ids["inputs_embeds_part2"])]
    up1 = Wn[np.asarray(prompt_ids["inputs_embeds_user_part1"])]
    up2 = Wn[np.asarray(prompt_ids["inputs_embeds_user_part2"])]
    dom = Wn[np.asarray(domain_ids)]
    pad = Wn[eos_token_id][None]

    ref_rows, ref_masks = [], []
    for i in range(B):
        tam = lens_np[i]
        seq = np.concatenate(
            [np.repeat(pad, P - tam, axis=0), part1, Wn[phrases[i]],
             up1, dom, up2, part2], axis=0)
        ref_rows.append(seq)
        ref_masks.append(np.concatenate(
            [np.zeros(P - tam, np.int32),
             np.ones(seq.shape[0] - (P - tam), np.int32)]))
    ref_emb = np.stack(ref_rows)
    ref_mask = np.stack(ref_masks)

    assert emb.shape == ref_emb.shape and mask.shape == ref_mask.shape
    assert np.allclose(np.asarray(emb), ref_emb, atol=1e-6)
    assert np.array_equal(np.asarray(mask), ref_mask)
    print("KERNEL_OK")
</pallas_src>

<mosaic_0001>
module attributes {stable_mosaic.version = 11 : i64} {
  func.func @_assemble_kernel(%arg0: i32, %arg1: memref<2xi32, #tpu.memory_space<smem>>, %arg2: memref<32xi32, #tpu.memory_space<smem>>, %arg3: memref<64x128xf32, #tpu.memory_space<any>>, %arg4: memref<21x128xf32, #tpu.memory_space<vmem>>, %arg5: memref<13x128xf32, #tpu.memory_space<vmem>>, %arg6: memref<1x34x128xf32, #tpu.memory_space<vmem>>, %arg7: memref<37x128xf32, #tpu.memory_space<vmem>>, %arg8: memref<17x!tpu.dma_semaphore, #tpu.memory_space<semaphore_mem>>) attributes {dimension_semantics = [#tpu.dimension_semantics<parallel>], iteration_bounds = array<i64: 2>, scalar_prefetch = 2 : i64, scratch_operands = 2 : i64, tpu.core_type = #tpu.core_type<tc>, window_params = [{}, {pipeline_mode = #tpu.pipeline_mode<synchronous>, transform_indices = @transform_1, window_bounds = array<i64: 21, 128>}, {pipeline_mode = #tpu.pipeline_mode<synchronous>, transform_indices = @transform_2, window_bounds = array<i64: 13, 128>}, {transform_indices = @transform_3, window_bounds = array<i64: 1, 34, 128>}]} {
    %0 = arith.index_cast %arg0 : i32 to index
    %1 = memref.load %arg1[%0] : memref<2xi32, #tpu.memory_space<smem>>
    %c0_i32 = arith.constant 0 : i32
    %2 = arith.subi %1, %c0_i32 : i32
    %c1_i32 = arith.constant 1 : i32
    %c1_i32_0 = arith.constant 1 : i32
    %3 = arith.subi %c1_i32, %c1_i32_0 : i32
    %4 = arith.addi %2, %3 : i32
    %c1_i32_1 = arith.constant 1 : i32
    %5 = arith.divsi %4, %c1_i32_1 : i32
    %c1_i32_2 = arith.constant 1 : i32
    %c0_i32_3 = arith.constant 0 : i32
    %c0_i32_4 = arith.constant 0 : i32
    %6 = arith.subi %5, %c0_i32_4 : i32
    %7 = arith.addi %c0_i32_4, %6 : i32
    %c1_i32_5 = arith.constant 1 : i32
    scf.for %arg9 = %c0_i32_4 to %7 step %c1_i32_5  : i32 {
      %30 = arith.muli %arg9, %c1_i32_2 : i32
      %31 = arith.addi %c0_i32_3, %30 : i32
      %c16_i32_30 = arith.constant 16 : i32
      %32 = arith.muli %arg0, %c16_i32_30 : i32
      %33 = arith.addi %32, %31 : i32
      %34 = arith.index_cast %33 : i32 to index
      %35 = memref.load %arg2[%34] : memref<32xi32, #tpu.memory_space<smem>>
      %c21_i32 = arith.constant 21 : i32
      %36 = arith.addi %c21_i32, %31 : i32
      %c0_i32_31 = arith.constant 0 : i32
      %37 = tpu.memref_slice %arg3[%35, %c0_i32_31] : memref<64x128xf32, #tpu.memory_space<any>> -> memref<1x128xf32, #tpu.memory_space<any>>
      %c0_i32_32 = arith.constant 0 : i32
      %38 = tpu.memref_slice %arg7[%36, %c0_i32_32] : memref<37x128xf32, #tpu.memory_space<vmem>> -> memref<1x128xf32, #tpu.memory_space<vmem>>
      %39 = tpu.memref_slice %arg8[%31] : memref<17x!tpu.dma_semaphore, #tpu.memory_space<semaphore_mem>> -> memref<1x!tpu.dma_semaphore, #tpu.memory_space<semaphore_mem>>
      %40 = tpu.memref_squeeze %39 : memref<1x!tpu.dma_semaphore, #tpu.memory_space<semaphore_mem>> -> memref<!tpu.dma_semaphore, #tpu.memory_space<semaphore_mem>>
      tpu.enqueue_dma source(%37 : memref<1x128xf32, #tpu.memory_space<any>>) target(%38 : memref<1x128xf32, #tpu.memory_space<vmem>>) target_semaphore(%40 : memref<!tpu.dma_semaphore, #tpu.memory_space<semaphore_mem>>)
    }
    %c0 = arith.constant 0 : index
    %c0_6 = arith.constant 0 : index
    %8 = vector.load %arg4[%c0, %c0_6] : memref<21x128xf32, #tpu.memory_space<vmem>>, vector<21x128xf32>
    %c0_7 = arith.constant 0 : index
    %c0_8 = arith.constant 0 : index
    %9 = vector.load %arg7[%c0_7, %c0_8] : memref<37x128xf32, #tpu.memory_space<vmem>>, vector<21x128xf32>
    tpu.vector_store %arg7[%c0_7, %c0_8], %8 {strides = array<i32>} : memref<37x128xf32, #tpu.memory_space<vmem>>, vector<21x128xf32>,
    %c0_9 = arith.constant 0 : index
    %c0_10 = arith.constant 0 : index
    %10 = vector.load %arg5[%c0_9, %c0_10] : memref<13x128xf32, #tpu.memory_space<vmem>>, vector<13x128xf32>
    %c0_11 = arith.constant 0 : index
    %c21 = arith.constant 21 : index
    %c0_12 = arith.constant 0 : index
    %11 = vector.load %arg6[%c0_11, %c21, %c0_12] : memref<1x34x128xf32, #tpu.memory_space<vmem>>, vector<1x13x128xf32>
    %12 = vector.shape_cast %11 : vector<1x13x128xf32> to vector<13x128xf32>
    %13 = vector.shape_cast %10 : vector<13x128xf32> to vector<1x13x128xf32>
    tpu.vector_store %arg6[%c0_11, %c21, %c0_12], %13 {strides = array<i32>} : memref<1x34x128xf32, #tpu.memory_space<vmem>>, vector<1x13x128xf32>,
    %c0_i32_13 = arith.constant 0 : i32
    %14 = arith.subi %1, %c0_i32_13 : i32
    %c1_i32_14 = arith.constant 1 : i32
    %c1_i32_15 = arith.constant 1 : i32
    %15 = arith.subi %c1_i32_14, %c1_i32_15 : i32
    %16 = arith.addi %14, %15 : i32
    %c1_i32_16 = arith.constant 1 : i32
    %17 = arith.divsi %16, %c1_i32_16 : i32
    %c1_i32_17 = arith.constant 1 : i32
    %c0_i32_18 = arith.constant 0 : i32
    %c0_i32_19 = arith.constant 0 : i32
    %18 = arith.subi %17, %c0_i32_19 : i32
    %19 = arith.addi %c0_i32_19, %18 : i32
    %c1_i32_20 = arith.constant 1 : i32
    scf.for %arg9 = %c0_i32_19 to %19 step %c1_i32_20  : i32 {
      %30 = arith.muli %arg9, %c1_i32_17 : i32
      %31 = arith.addi %c0_i32_18, %30 : i32
      %c21_i32 = arith.constant 21 : i32
      %32 = arith.addi %c21_i32, %31 : i32
      %c0_i32_30 = arith.constant 0 : i32
      %c0_i32_31 = arith.constant 0 : i32
      %33 = tpu.memref_slice %arg3[%c0_i32_30, %c0_i32_31] : memref<64x128xf32, #tpu.memory_space<any>> -> memref<1x128xf32, #tpu.memory_space<any>>
      %c0_i32_32 = arith.constant 0 : i32
      %34 = tpu.memref_slice %arg7[%32, %c0_i32_32] : memref<37x128xf32, #tpu.memory_space<vmem>> -> memref<1x128xf32, #tpu.memory_space<vmem>>
      %35 = tpu.memref_slice %arg8[%31] : memref<17x!tpu.dma_semaphore, #tpu.memory_space<semaphore_mem>> -> memref<1x!tpu.dma_semaphore, #tpu.memory_space<semaphore_mem>>
      %36 = tpu.memref_squeeze %35 : memref<1x!tpu.dma_semaphore, #tpu.memory_space<semaphore_mem>> -> memref<!tpu.dma_semaphore, #tpu.memory_space<semaphore_mem>>
      tpu.wait_dma2 semaphore(%36 : memref<!tpu.dma_semaphore, #tpu.memory_space<semaphore_mem>>) src(%33 : memref<1x128xf32, #tpu.memory_space<any>>) dst(%34 : memref<1x128xf32, #tpu.memory_space<vmem>>)
    }
    %c16_i32 = arith.constant 16 : i32
    %c0_i32_21 = arith.constant 0 : i32
    %20 = tpu.memref_slice %arg7[%1, %c0_i32_21] : memref<37x128xf32, #tpu.memory_space<vmem>> -> memref<21x128xf32, #tpu.memory_space<vmem>>
    %c0_i32_22 = arith.constant 0 : i32
    %c0_i32_23 = arith.constant 0 : i32
    %c0_i32_24 = arith.constant 0 : i32
    %21 = tpu.memref_slice %arg6[%c0_i32_22, %c0_i32_23, %c0_i32_24] : memref<1x34x128xf32, #tpu.memory_space<vmem>> -> memref<1x21x128xf32, #tpu.memory_space<vmem>>
    %22 = tpu.memref_squeeze %21 : memref<1x21x128xf32, #tpu.memory_space<vmem>> -> memref<21x128xf32, #tpu.memory_space<vmem>>
    %23 = tpu.memref_slice %arg8[%c16_i32] : memref<17x!tpu.dma_semaphore, #tpu.memory_space<semaphore_mem>> -> memref<1x!tpu.dma_semaphore, #tpu.memory_space<semaphore_mem>>
    %24 = tpu.memref_squeeze %23 : memref<1x!tpu.dma_semaphore, #tpu.memory_space<semaphore_mem>> -> memref<!tpu.dma_semaphore, #tpu.memory_space<semaphore_mem>>
    tpu.enqueue_dma source(%20 : memref<21x128xf32, #tpu.memory_space<vmem>>) target(%22 : memref<21x128xf32, #tpu.memory_space<vmem>>) target_semaphore(%24 : memref<!tpu.dma_semaphore, #tpu.memory_space<semaphore_mem>>)
    %c16_i32_25 = arith.constant 16 : i32
    %c0_i32_26 = arith.constant 0 : i32
    %25 = tpu.memref_slice %arg7[%1, %c0_i32_26] : memref<37x128xf32, #tpu.memory_space<vmem>> -> memref<21x128xf32, #tpu.memory_space<vmem>>
    %c0_i32_27 = arith.constant 0 : i32
    %c0_i32_28 = arith.constant 0 : i32
    %c0_i32_29 = arith.constant 0 : i32
    %26 = tpu.memref_slice %arg6[%c0_i32_27, %c0_i32_28, %c0_i32_29] : memref<1x34x128xf32, #tpu.memory_space<vmem>> -> memref<1x21x128xf32, #tpu.memory_space<vmem>>
    %27 = tpu.memref_squeeze %26 : memref<1x21x128xf32, #tpu.memory_space<vmem>> -> memref<21x128xf32, #tpu.memory_space<vmem>>
    %28 = tpu.memref_slice %arg8[%c16_i32_25] : memref<17x!tpu.dma_semaphore, #tpu.memory_space<semaphore_mem>> -> memref<1x!tpu.dma_semaphore, #tpu.memory_space<semaphore_mem>>
    %29 = tpu.memref_squeeze %28 : memref<1x!tpu.dma_semaphore, #tpu.memory_space<semaphore_mem>> -> memref<!tpu.dma_semaphore, #tpu.memory_space<semaphore_mem>>
    tpu.wait_dma2 semaphore(%29 : memref<!tpu.dma_semaphore, #tpu.memory_space<semaphore_mem>>) src(%25 : memref<21x128xf32, #tpu.memory_space<vmem>>) dst(%27 : memref<21x128xf32, #tpu.memory_space<vmem>>)
    return
  }
  func.func @transform_1(%arg0: i32, %arg1: memref<2xi32, #tpu.memory_space<smem>>, %arg2: memref<32xi32, #tpu.memory_space<smem>>) -> (i32, i32) {
    %c0_i32 = arith.constant 0 : i32
    %c0_i32_0 = arith.constant 0 : i32
    %c0_i32_1 = arith.constant 0 : i32
    return %c0_i32, %c0_i32_0 : i32, i32
  }
  func.func @transform_2(%arg0: i32, %arg1: memref<2xi32, #tpu.memory_space<smem>>, %arg2: memref<32xi32, #tpu.memory_space<smem>>) -> (i32, i32) {
    %c0_i32 = arith.constant 0 : i32
    %c0_i32_0 = arith.constant 0 : i32
    %c0_i32_1 = arith.constant 0 : i32
    return %c0_i32, %c0_i32_0 : i32, i32
  }
  func.func @transform_3(%arg0: i32, %arg1: memref<2xi32, #tpu.memory_space<smem>>, %arg2: memref<32xi32, #tpu.memory_space<smem>>) -> (i32, i32, i32) {
    %c0_i32 = arith.constant 0 : i32
    %c0_i32_0 = arith.constant 0 : i32
    %c0_i32_1 = arith.constant 0 : i32
    return %arg0, %c0_i32, %c0_i32_0 : i32, i32, i32
  }
}

</mosaic_0001>

<llo_original>
// kernel: tpu_custom_call.1
$region0: #{tpu_custom_call.1}
  #allocation0 [shape = 'u32[]', space=smem, size = 0x4, offset = 0x4, fixed_abs, tag = 'smem constant byte address 0x4 - core index']
  #allocation1 [shape = 'u32[144,128]{1,0:T(1,128)}', space=vmem, size = 0x12000, scoped, tag = 'internal scratch']
  #allocation2 [shape = 'f32[37,128]{1,0:T(8,128)}', space=vmem, size = 0x5000, scoped, tag = 'scratch operand']
  #allocation3 [shape = 's32[17]{0}', space=sflag, size = 0x44, scoped, tag = 'scratch operand']
  #allocation4 [shape = 's32[1]{0}', space=sflag, size = 0x4, scoped, tag = 'scoped memory for tpu_custom_call.1']
  #allocation5 [shape = 'u8[512]{0}', space=smem, size = 0x200, scoped, tag = 'prefetched SMEM operand 0']
  #allocation6 [shape = 'u8[512]{0}', space=smem, size = 0x200, scoped, tag = 'prefetched SMEM operand 1']
  #allocation11 [shape = 's32[]', space=sflag, size = 0x4, offset = 0, fixed_abs, tag = 'sflag constant byte address 0x0 - dummy sync flag']
  #allocation12 [shape = 's32[]', space=sflag, size = 0x4, offset = 0, fixed_abs, tag = 'sflag constant byte address 0x0 - dummy sync flag']
  #allocation13 [shape = 'u32[]', space=smem, size = 0x4, offset = 0x44, fixed_abs, tag = 'smem constant byte address 0x44 - assertion arg 0']
  #allocation14 [shape = 'u32[]', space=smem, size = 0x4, offset = 0x48, fixed_abs, tag = 'smem constant byte address 0x48 - assertion arg 1']
  #allocation15 [shape = 's32[]', space=sflag, size = 0x4, offset = 0, fixed_abs, tag = 'sflag constant byte address 0x0 - dummy sync flag']
  %s0 = inlined_call_operand.hbm [shape: s32[2], index: 0, kind: input, shape index: {}]
  %s1 = inlined_call_operand.vmem [shape: s32[32], index: 1, kind: input, shape index: {}]
  %s2 = inlined_call_operand.hbm [shape: f32[64,128], index: 2, kind: input, shape index: {}]
  %s3 = inlined_call_operand.hbm [shape: f32[21,128], index: 3, kind: input, shape index: {}]
  %s4 = inlined_call_operand.hbm [shape: f32[13,128], index: 4, kind: input, shape index: {}]
  %s5 = inlined_call_operand.vmem [shape: f32[2,34,128], index: 5, kind: output, shape index: {}]
  %s6 = sld [smem:[#allocation0]]
  $region104: #{tpu_custom_call.1} parent=0
    _
  %s8 = ssub.s32 1, %s6
  %s9 = scalar_select 0, %s8, %s6
  %11 = dma.hbm_to_smem %s0, 16, [#allocation5], [#allocation4]
  %s12 = sshll.u32 %s1, 4
  %s13 = int_to_ptr.vmem [resolvable:$true] %s12
  %15 = dma.vmem_to_smem %s13, 16, [#allocation6], [#allocation4]
  %16 = dma.done [#allocation4], 32
  %17 = sfence
  $region1: #{tpu_custom_call.1} parent=0
    #allocation7 [shape = 'u8[12288]{0}', space=vmem, size = 0x3000, scoped, tag = 'input window, operand 3, single buffered']
    #allocation8 [shape = 's32[2]{0}', space=sflag, size = 0x8, scoped, tag = 'scoped memory for tpu_custom_call.1']
    #allocation9 [shape = 'u8[8192]{0}', space=vmem, size = 0x2000, scoped, tag = 'input window, operand 4, single buffered']
    #allocation10 [shape = 's32[1]{0}', space=sflag, size = 0x4, scoped, tag = 'scoped memory for tpu_custom_call.1']
    %18 = vsyncpa [#allocation8], 0
    %19 = vsyncpa [#allocation10], 0
    loop: start=0, step=1, limit=4
    $region2: #{tpu_custom_call.1} parent=1 // loop_pre_header
      _
    $region3: #{tpu_custom_call.1} parent=1 // loop_header
      %s21 = sphi 0, %s25
      %p22 = scmp.ge.s32.totalorder %s21, 4
      %s29 = sphi 0, %s29
      %s31 = sphi 0, %s29
      %s32 = sphi 0, %s31
      %s46 = sphi 0, %s32
      %s50 = sphi 0, %s50
      %s52 = sphi 0, %s50
      %s53 = sphi 0, %s52
      %s67 = sphi 0, %s53
      %s73 = sphi 0, %s75
      %s76 = sphi 0, %s73
      %s77 = sphi 0, %s76
      %s93 = sphi 0, %s77
    $region4: #{tpu_custom_call.1} parent=1 // loop_header_branch
      %24 = sbr.rel (%p22) target = $region8
    $region5: #{tpu_custom_call.1} parent=1 // loop_body
      %s26 = ssub.s32 %s21, 1
      %s27 = ssub.s32 %s21, 2
      %s28 = sadd.s32 %s21, 1
      %s30 = sadd.s32 %s29, 1
      %p33 = scmp.eq.s32.totalorder %s21, 1
      %p34 = scmp.ne.s32.totalorder %s29, %s31
      %p35 = scmp.eq.s32.totalorder %s21, 0
      %p36 = por %p34, %p35
      %p37 = scmp.ne.s32.totalorder %s29, %s31
      %p38 = scmp.eq.s32.totalorder %s26, 1
      %p39 = por %p37, %p38
      %p40 = scmp.ne.s32.totalorder %s31, %s32
      %p41 = scmp.eq.s32.totalorder %s26, 0
      %p42 = por %p40, %p41
      %p43 = scmp.ne.s32.totalorder %s31, %s32
      %p44 = scmp.eq.s32.totalorder %s27, 1
      %p45 = por %p43, %p44
      %p47 = scmp.ne.s32.totalorder %s32, %s46
      %p48 = scmp.eq.s32.totalorder %s27, 0
      %p49 = por %p47, %p48
      %s51 = sadd.s32 %s50, 1
      %p54 = scmp.eq.s32.totalorder %s21, 1
      %p55 = scmp.ne.s32.totalorder %s50, %s52
      %p56 = scmp.eq.s32.totalorder %s21, 0
      %p57 = por %p55, %p56
      %p58 = scmp.ne.s32.totalorder %s50, %s52
      %p59 = scmp.eq.s32.totalorder %s26, 1
      %p60 = por %p58, %p59
      %p61 = scmp.ne.s32.totalorder %s52, %s53
      %p62 = scmp.eq.s32.totalorder %s26, 0
      %p63 = por %p61, %p62
      %p64 = scmp.ne.s32.totalorder %s52, %s53
      %p65 = scmp.eq.s32.totalorder %s27, 1
      %p66 = por %p64, %p65
      %p68 = scmp.ne.s32.totalorder %s53, %s67
      %p69 = scmp.eq.s32.totalorder %s27, 0
      %p70 = por %p68, %p69
      %s71 = ssub.s32 %s21, %s28
      %p72 = scmp.eq.s32.totalorder %s71, 0
      %s74 = sadd.s32 %s73, 1
      %s75 = scalar_select %p72, %s73, %s74
      %p78 = pneg %p72
      %p79 = scmp.eq.s32.totalorder %s21, 1
      %p80 = por %p78, %p79
      %p81 = scmp.ne.s32.totalorder %s73, %s76
      %p82 = scmp.eq.s32.totalorder %s21, 0
      %p83 = por %p81, %p82
      %p84 = scmp.ne.s32.totalorder %s73, %s76
      %p85 = scmp.eq.s32.totalorder %s26, 1
      %p86 = por %p84, %p85
      %p87 = scmp.ne.s32.totalorder %s76, %s77
      %p88 = scmp.eq.s32.totalorder %s26, 0
      %p89 = por %p87, %p88
      %p90 = scmp.ne.s32.totalorder %s76, %s77
      %p91 = scmp.eq.s32.totalorder %s27, 1
      %p92 = por %p90, %p91
      %p94 = scmp.ne.s32.totalorder %s77, %s93
      %p95 = scmp.eq.s32.totalorder %s27, 0
      %p96 = por %p94, %p95
      %p97 = scmp.le.s32.totalorder 1, %s21
      %p98 = scmp.lt.s32.totalorder %s21, 3
      %p99 = pnand %p97, %p98
      %p100 = pneg %p99
      // Predicated region
      $region9: #{tpu_custom_call.1} parent=5 // pred_check
        _
      $region10: #{tpu_custom_call.1} parent=5 // pred_check_branch
        %102 = sbr.rel (%p99) target = $region12
      $region11: #{tpu_custom_call.1} parent=5 // pred_region
        %s103 = ssub.s32 %s21, 1
        // Predicated region
        $region13: #{tpu_custom_call.1} parent=11 // pred_check
          %p104 = pneg %p42
        $region14: #{tpu_custom_call.1} parent=11 // pred_check_branch
          %106 = sbr.rel (%p104) target = $region16
        $region15: #{tpu_custom_call.1} parent=11 // pred_region
          %s108 = ssub.s32 384, 384
          %109 = vsyncadd [#allocation8], %s108
          %s110 = sshll.u32 [#allocation7], 4
          %s111 = int_to_ptr.vmem [resolvable:$true] %s110
          %116 = dma.hbm_to_vmem [thread:$0]  %s3, 384, %s111, [#allocation8], 128, 128, 8
        $region16: #{tpu_custom_call.1} parent=11 // pred_fallthru
          _
        // Predicated region
        $region17: #{tpu_custom_call.1} parent=11 // pred_check
          %p117 = pneg %p63
        $region18: #{tpu_custom_call.1} parent=11 // pred_check_branch
          %119 = sbr.rel (%p117) target = $region20
        $region19: #{tpu_custom_call.1} parent=11 // pred_region
          %s121 = ssub.s32 256, 256
          %122 = vsyncadd [#allocation10], %s121
          %s123 = sshll.u32 [#allocation9], 4
          %s124 = int_to_ptr.vmem [resolvable:$true] %s123
          %129 = dma.hbm_to_vmem [thread:$0]  %s4, 256, %s124, [#allocation10], 128, 128, 8
        $region20: #{tpu_custom_call.1} parent=11 // pred_fallthru
          _
      $region12: #{tpu_custom_call.1} parent=5 // pred_fallthru
        _
      %p130 = scmp.lt.s32.totalorder %s21, 2
      // Predicated region
      $region21: #{tpu_custom_call.1} parent=5 // pred_check
        %p131 = pneg %p130
      $region22: #{tpu_custom_call.1} parent=5 // pred_check_branch
        %133 = sbr.rel (%p131) target = $region24
      $region23: #{tpu_custom_call.1} parent=5 // pred_region
        _
      $region24: #{tpu_custom_call.1} parent=5 // pred_fallthru
        _
      %p134 = scmp.le.s32.totalorder 1, %s21
      %p135 = scmp.lt.s32.totalorder %s21, 3
      %p136 = pnand %p134, %p135
      %p137 = pneg %p136
      // Predicated region
      $region25: #{tpu_custom_call.1} parent=5 // pred_check
        _
      $region26: #{tpu_custom_call.1} parent=5 // pred_check_branch
        %139 = sbr.rel (%p136) target = $region28
      $region27: #{tpu_custom_call.1} parent=5 // pred_region
        %s140 = ssub.s32 %s21, 1
        // Predicated region
        $region29: #{tpu_custom_call.1} parent=27 // pred_check
          %p141 = pneg %p42
        $region30: #{tpu_custom_call.1} parent=27 // pred_check_branch
          %143 = sbr.rel (%p141) target = $region32
        $region31: #{tpu_custom_call.1} parent=27 // pred_region
          %144 = dma.done [#allocation8], 384
        $region32: #{tpu_custom_call.1} parent=27 // pred_fallthru
          _
        // Predicated region
        $region33: #{tpu_custom_call.1} parent=27 // pred_check
          %p145 = pneg %p63
        $region34: #{tpu_custom_call.1} parent=27 // pred_check_branch
          %147 = sbr.rel (%p145) target = $region36
        $region35: #{tpu_custom_call.1} parent=27 // pred_region
          %148 = dma.done [#allocation10], 256
        $region36: #{tpu_custom_call.1} parent=27 // pred_fallthru
          _
        %p149 = pneg %p42
        %p150 = pneg %p39
        %p151 = pneg %p63
        %p152 = pneg %p60
        %p153 = pneg %p89
        %p154 = pneg %p86
        %p155 = scmp.lt.s32.totalorder %s26, 1
        %s156 = scalar_select %p155, %s26, 1
        %s157 = smul.addr %s156, 5
        %s158 = smul.addr %s157, 8
        %s159 = scalar_lea.vmem %s5, %s158
        %p160 = scmp.lt.s32.totalorder %s26, 1
        %s161 = scalar_select %p160, %s26, 1
        %s162 = smul.addr %s161, 5
        %s163 = smul.addr %s162, 8
        %s164 = scalar_lea.vmem %s5, %s163
        %s165 = sld [smem:[#allocation5 + %s26]]
        // While loop
        $region37: #{tpu_custom_call.1} parent=27 // loop_pre_header
          _
        $region38: #{tpu_custom_call.1} parent=27 // loop_header
          %s167 = sphi 0, %s169
          %p168 = scmp.ge.s32.totalorder %s167, %s165
        $region39: #{tpu_custom_call.1} parent=27 // loop_header_branch
          %171 = sbr.rel (%p168) target = $region43
        $region40: #{tpu_custom_call.1} parent=27 // loop_body
          %s172 = smul.u32 %s26, 16
          %s173 = sadd.s32 %s172, %s167
          %s174 = sld [smem:[#allocation6 + %s173]]
          %s175 = sadd.s32 %s167, 21
          %s176 = smul.addr %s174, 16
          %s177 = scalar_lea.hbm %s2, %s176
          %s178 = scalar_lea.vmem [#allocation2], %s175
          %s179 = scalar_lea.sflag [#allocation3], %s167
          // Predicated region
          $region44: #{tpu_custom_call.1} parent=40 // pred_check
            _
          $region45: #{tpu_custom_call.1} parent=40 // pred_check_branch
            %181 = sbr.rel target = $region47
          $region46: #{tpu_custom_call.1} parent=40 // pred_region
            %182 = sst [smem:[#allocation13]] [#allocation12]
            %183 = sst [smem:[#allocation14]] [#allocation11]
          $region47: #{tpu_custom_call.1} parent=40 // pred_fallthru
            _
          %185 = shalt.err (0)
          %s187 = sshll.u32 %s178, 4
          %s188 = int_to_ptr.vmem [resolvable:$true] %s187
          %190 = dma.hbm_to_vmem [thread:$0]  %s177, 16, %s188, %s179
        $region41: #{tpu_custom_call.1} parent=27 // loop_footer
          %s169 = sadd.s32 %s167, 1
        $region42: #{tpu_custom_call.1} parent=27 // loop_footer_branch
          %166 = sbr.rel target = $region38
        $region43: #{tpu_custom_call.1} parent=27 // loop_exit
          _
        %v191 = vld [vmem:[#allocation7] sm:$0xff]
        %v192 = vld [vmem:[#allocation7 + $0x8] sm:$0xff]
        %v193 = vld [vmem:[#allocation7 + $0x10] sm:$0x1f]
        %194 = vst [vmem:[#allocation2] sm:$0xff] %v191
        %195 = vst [vmem:[#allocation2 + $0x8] sm:$0xff] %v192
        %196 = vst [vmem:[#allocation2 + $0x10] sm:$0x1f] %v193
        %v197 = vld [vmem:[#allocation9] sm:$0xff]
        %v198 = vld [vmem:[#allocation9 + $0x8] sm:$0x1f]
        %199 = vst [vmem:[%s164 + $0x15] sm:$0xff] %v197
        %200 = vst [vmem:[%s164 + $0x1d] sm:$0x1f] %v198
        // While loop
        $region48: #{tpu_custom_call.1} parent=27 // loop_pre_header
          _
        $region49: #{tpu_custom_call.1} parent=27 // loop_header
          %s202 = sphi 0, %s204
          %p203 = scmp.ge.s32.totalorder %s202, %s165
        $region50: #{tpu_custom_call.1} parent=27 // loop_header_branch
          %206 = sbr.rel (%p203) target = $region54
        $region51: #{tpu_custom_call.1} parent=27 // loop_body
          %s207 = scalar_lea.sflag [#allocation3], %s202
          %s208 = smul.u32 1, 1
          %s209 = sshll.u32 %s208, 4
          %210 = dma.done %s207, %s209
        $region52: #{tpu_custom_call.1} parent=27 // loop_footer
          %s204 = sadd.s32 %s202, 1
        $region53: #{tpu_custom_call.1} parent=27 // loop_footer_branch
          %201 = sbr.rel target = $region49
        $region54: #{tpu_custom_call.1} parent=27 // loop_exit
          _
        %s211 = scalar_lea.vmem [#allocation2], %s165
        %s212 = scalar_lea.sflag [#allocation3], 16
        %p214 = scmp.lt.u32.totalorder 21, 8
        %p215 = pneg %p214
        // Predicated region
        $region55: #{tpu_custom_call.1} parent=27 // pred_check
          _
        $region56: #{tpu_custom_call.1} parent=27 // pred_check_branch
          %217 = sbr.rel (%p214) target = $region58
        $region57: #{tpu_custom_call.1} parent=27 // pred_region
          %s232 = sand.u32 21, 7
          %p233 = scmp.eq.s32.totalorder %s232, 0
          %p234 = pneg %p233
          // Predicated region
          $region70: #{tpu_custom_call.1} parent=57 // pred_check
            _
          $region71: #{tpu_custom_call.1} parent=57 // pred_check_branch
            %236 = sbr.rel (%p233) target = $region73
          $region72: #{tpu_custom_call.1} parent=57 // pred_region
            %s237 = sand.u32 21, 7
            %s238 = ssub.s32 21, %s237
            %s239 = scalar_lea.vmem %s211, %s238 [#allocation2]
            %s240 = ssub.s32 21, %s237
            %s241 = scalar_lea.vmem %s164, %s240
            loop: start=0, step=1, limit=1
            $region74: #{tpu_custom_call.1} parent=72 // loop_pre_header
              _
            $region75: #{tpu_custom_call.1} parent=72 // loop_header
              %s243 = sphi 0, %s247
              %p244 = scmp.ge.s32.totalorder %s243, 1
              %s248 = sphi %s211, %s211
              %s249 = sphi %s164, %s164
            $region76: #{tpu_custom_call.1} parent=72 // loop_header_branch
              %246 = sbr.rel (%p244) target = $region80
            $region77: #{tpu_custom_call.1} parent=72 // loop_body
              %v250 = vld [vmem:[%s248] sm:$0xff]
              %251 = vst [vmem:[%s249] sm:$0xff] %v250
              %v252 = vld [vmem:[%s248 + $0x8] sm:$0xff]
              %253 = vst [vmem:[%s249 + $0x8] sm:$0xff] %v252
            $region78: #{tpu_custom_call.1} parent=72 // loop_footer
              %s247 = sadd.s32 1, %s243
            $region79: #{tpu_custom_call.1} parent=72 // loop_footer_branch
              %242 = sbr.rel target = $region75
            $region80: #{tpu_custom_call.1} parent=72 // loop_exit
              _
            %s254 = sshllo.u32 0, %s237
            loop: start=0, step=1, limit=1
            $region81: #{tpu_custom_call.1} parent=72 // loop_pre_header
              _
            $region82: #{tpu_custom_call.1} parent=72 // loop_header
              %s256 = sphi 0, %s260
              %p257 = scmp.ge.s32.totalorder %s256, 1
              %s261 = sphi %s239, %s239
              %s262 = sphi %s241, %s241
            $region83: #{tpu_custom_call.1} parent=72 // loop_header_branch
              %259 = sbr.rel (%p257) target = $region87
            $region84: #{tpu_custom_call.1} parent=72 // loop_body
              %v263 = vld [vmem:[%s261] sm:%s254]
              %264 = vst [vmem:[%s262] sm:%s254] %v263
            $region85: #{tpu_custom_call.1} parent=72 // loop_footer
              %s260 = sadd.s32 1, %s256
            $region86: #{tpu_custom_call.1} parent=72 // loop_footer_branch
              %255 = sbr.rel target = $region82
            $region87: #{tpu_custom_call.1} parent=72 // loop_exit
              _
          $region73: #{tpu_custom_call.1} parent=57 // pred_fallthru
            _
        $region58: #{tpu_custom_call.1} parent=27 // pred_fallthru
          _
        // Predicated region
        $region59: #{tpu_custom_call.1} parent=27 // pred_check
          %p218 = pneg %p214
        $region60: #{tpu_custom_call.1} parent=27 // pred_check_branch
          %220 = sbr.rel (%p218) target = $region62
        $region61: #{tpu_custom_call.1} parent=27 // pred_region
          %s221 = sshllo.u32 0, 21
          loop: start=0, step=1, limit=1
          $region63: #{tpu_custom_call.1} parent=61 // loop_pre_header
            _
          $region64: #{tpu_custom_call.1} parent=61 // loop_header
            %s223 = sphi 0, %s227
            %p224 = scmp.ge.s32.totalorder %s223, 1
            %s228 = sphi %s211, %s211
            %s229 = sphi %s164, %s164
          $region65: #{tpu_custom_call.1} parent=61 // loop_header_branch
            %226 = sbr.rel (%p224) target = $region69
          $region66: #{tpu_custom_call.1} parent=61 // loop_body
            %v230 = vld [vmem:[%s228] sm:%s221]
            %231 = vst [vmem:[%s229] sm:%s221] %v230
          $region67: #{tpu_custom_call.1} parent=61 // loop_footer
            %s227 = sadd.s32 1, %s223
          $region68: #{tpu_custom_call.1} parent=61 // loop_footer_branch
            %222 = sbr.rel target = $region64
          $region69: #{tpu_custom_call.1} parent=61 // loop_exit
            _
        $region62: #{tpu_custom_call.1} parent=27 // pred_fallthru
          _
        // Predicated region
        $region88: #{tpu_custom_call.1} parent=27 // pred_check
          _
        $region89: #{tpu_custom_call.1} parent=27 // pred_check_branch
          %267 = sbr.rel (0) target = $region91
        $region90: #{tpu_custom_call.1} parent=27 // pred_region
          %268 = vsyncadd %s212, 336
        $region91: #{tpu_custom_call.1} parent=27 // pred_fallthru
          _
        %s269 = smul.u32 21, 1
        %s270 = sshll.u32 %s269, 4
        %271 = dma.done %s212, %s270
        %p272 = scmp.lt.s32.totalorder %s26, 1
        %s273 = scalar_select %p272, %s26, 1
        %s274 = smul.addr %s273, 5
        %s275 = smul.addr %s274, 8
        %s276 = scalar_lea.vmem %s5, %s275
        // Predicated region
        $region92: #{tpu_custom_call.1} parent=27 // pred_check
          %p277 = pneg %p86
        $region93: #{tpu_custom_call.1} parent=27 // pred_check_branch
          %279 = sbr.rel (%p277) target = $region95
        $region94: #{tpu_custom_call.1} parent=27 // pred_region
          _
        $region95: #{tpu_custom_call.1} parent=27 // pred_fallthru
          _
      $region28: #{tpu_custom_call.1} parent=5 // pred_fallthru
        _
      %p280 = scmp.le.s32.totalorder 2, %s21
      // Predicated region
      $region96: #{tpu_custom_call.1} parent=5 // pred_check
        %p281 = pneg %p280
      $region97: #{tpu_custom_call.1} parent=5 // pred_check_branch
        %283 = sbr.rel (%p281) target = $region99
      $region98: #{tpu_custom_call.1} parent=5 // pred_region
        %s284 = ssub.s32 %s21, 2
        // Predicated region
        $region100: #{tpu_custom_call.1} parent=98 // pred_check
          %p285 = pneg %p92
        $region101: #{tpu_custom_call.1} parent=98 // pred_check_branch
          %287 = sbr.rel (%p285) target = $region103
        $region102: #{tpu_custom_call.1} parent=98 // pred_region
          %p288 = scmp.lt.s32.totalorder %s27, 1
          %s289 = scalar_select %p288, %s27, 1
          %s290 = smul.addr %s289, 5
          %s291 = smul.addr %s290, 8
          %s292 = scalar_lea.vmem %s5, %s291
        $region103: #{tpu_custom_call.1} parent=98 // pred_fallthru
          _
      $region99: #{tpu_custom_call.1} parent=5 // pred_fallthru
        _
    $region6: #{tpu_custom_call.1} parent=1 // loop_footer
      %s25 = sadd.s32 1, %s21
    $region7: #{tpu_custom_call.1} parent=1 // loop_footer_branch
      %20 = sbr.rel target = $region3
    $region8: #{tpu_custom_call.1} parent=1 // loop_exit
      _
    %293 = vsyncpa [#allocation8], 1
    %s294 = scalar_lea.sflag [#allocation8], 1
    %295 = vsyncpa %s294, 1
    %296 = vsyncpa [#allocation10], 1
  %297 = vsyncmov [#allocation3]
  %s298 = vpop.sfrf %297
  %p299 = scmp.eq.s32.totalorder %s298, 0
  %p300 = pneg %p299
  %302 = shalt.err (%p300)
  %s303 = scalar_lea.sflag [#allocation3], 1
  %304 = vsyncmov %s303
  %s305 = vpop.sfrf %304
  %p306 = scmp.eq.s32.totalorder %s305, 0
  %p307 = pneg %p306
  %309 = shalt.err (%p307)
  %s310 = scalar_lea.sflag [#allocation3], 2
  %311 = vsyncmov %s310
  %s312 = vpop.sfrf %311
  %p313 = scmp.eq.s32.totalorder %s312, 0
  %p314 = pneg %p313
  %316 = shalt.err (%p314)
  %s317 = scalar_lea.sflag [#allocation3], 3
  %318 = vsyncmov %s317
  %s319 = vpop.sfrf %318
  %p320 = scmp.eq.s32.totalorder %s319, 0
  %p321 = pneg %p320
  %323 = shalt.err (%p321)
  %s324 = scalar_lea.sflag [#allocation3], 4
  %325 = vsyncmov %s324
  %s326 = vpop.sfrf %325
  %p327 = scmp.eq.s32.totalorder %s326, 0
  %p328 = pneg %p327
  %330 = shalt.err (%p328)
  %s331 = scalar_lea.sflag [#allocation3], 5
  %332 = vsyncmov %s331
  %s333 = vpop.sfrf %332
  %p334 = scmp.eq.s32.totalorder %s333, 0
  %p335 = pneg %p334
  %337 = shalt.err (%p335)
  %s338 = scalar_lea.sflag [#allocation3], 6
  %339 = vsyncmov %s338
  %s340 = vpop.sfrf %339
  %p341 = scmp.eq.s32.totalorder %s340, 0
  %p342 = pneg %p341
  %344 = shalt.err (%p342)
  %s345 = scalar_lea.sflag [#allocation3], 7
  %346 = vsyncmov %s345
  %s347 = vpop.sfrf %346
  %p348 = scmp.eq.s32.totalorder %s347, 0
  %p349 = pneg %p348
  %351 = shalt.err (%p349)
  %s352 = scalar_lea.sflag [#allocation3], 8
  %353 = vsyncmov %s352
  %s354 = vpop.sfrf %353
  %p355 = scmp.eq.s32.totalorder %s354, 0
  %p356 = pneg %p355
  %358 = shalt.err (%p356)
  %s359 = scalar_lea.sflag [#allocation3], 9
  %360 = vsyncmov %s359
  %s361 = vpop.sfrf %360
  %p362 = scmp.eq.s32.totalorder %s361, 0
  %p363 = pneg %p362
  %365 = shalt.err (%p363)
  %s366 = scalar_lea.sflag [#allocation3], 10
  %367 = vsyncmov %s366
  %s368 = vpop.sfrf %367
  %p369 = scmp.eq.s32.totalorder %s368, 0
  %p370 = pneg %p369
  %372 = shalt.err (%p370)
  %s373 = scalar_lea.sflag [#allocation3], 11
  %374 = vsyncmov %s373
  %s375 = vpop.sfrf %374
  %p376 = scmp.eq.s32.totalorder %s375, 0
  %p377 = pneg %p376
  %379 = shalt.err (%p377)
  %s380 = scalar_lea.sflag [#allocation3], 12
  %381 = vsyncmov %s380
  %s382 = vpop.sfrf %381
  %p383 = scmp.eq.s32.totalorder %s382, 0
  %p384 = pneg %p383
  %386 = shalt.err (%p384)
  %s387 = scalar_lea.sflag [#allocation3], 13
  %388 = vsyncmov %s387
  %s389 = vpop.sfrf %388
  %p390 = scmp.eq.s32.totalorder %s389, 0
  %p391 = pneg %p390
  %393 = shalt.err (%p391)
  %s394 = scalar_lea.sflag [#allocation3], 14
  %395 = vsyncmov %s394
  %s396 = vpop.sfrf %395
  %p397 = scmp.eq.s32.totalorder %s396, 0
  %p398 = pneg %p397
  %400 = shalt.err (%p398)
  %s401 = scalar_lea.sflag [#allocation3], 15
  %402 = vsyncmov %s401
  %s403 = vpop.sfrf %402
  %p404 = scmp.eq.s32.totalorder %s403, 0
  %p405 = pneg %p404
  %407 = shalt.err (%p405)
  %s408 = scalar_lea.sflag [#allocation3], 16
  %409 = vsyncmov %s408
  %s410 = vpop.sfrf %409
  %p411 = scmp.eq.s32.totalorder %s410, 0
  %p412 = pneg %p411
  %414 = shalt.err (%p412)

</llo_original>
